<compile_context>
chip_gen: v5e
topology: v5e:2x2
jax: 0.10.0
libtpu: 0.0.40
codegen_flags: <defaults>
</compile_context>

<pallas_src>
import jax
import jax.numpy as jnp
from jax.experimental import pallas as pl
from jax.experimental.pallas import tpu as pltpu


def _stats_kernel(x_ref, w_ref, sum_ref, ssq_ref):
    # x_ref: (C_in, tile_hw), w_ref: (C_out, C_in)
    # sum_ref / ssq_ref: (C_out, 1) accumulators, resident per batch index n
    # (output block index is constant along the trailing "arbitrary" grid axis).
    t = pl.program_id(1)

    @pl.when(t == 0)
    def _():
        sum_ref[...] = jnp.zeros_like(sum_ref)
        ssq_ref[...] = jnp.zeros_like(ssq_ref)

    u = jnp.dot(w_ref[...], x_ref[...], preferred_element_type=jnp.float32)
    sum_ref[...] += jnp.sum(u, axis=-1, keepdims=True)
    ssq_ref[...] += jnp.sum(u * u, axis=-1, keepdims=True)


def _fused_conv_bn_lrelu_kernel(x_ref, w_ref, scale_ref, shift_ref, o_ref):
    # Recompute u = W @ x (K = C_in is tiny, MXU work is negligible) and apply
    # the fused BN affine + LeakyReLU; single lane-dense store to HBM.
    u = jnp.dot(w_ref[...], x_ref[...], preferred_element_type=jnp.float32)
    z = u * scale_ref[...] + shift_ref[...]
    o_ref[...] = jnp.where(z >= 0, z, 0.01 * z).astype(o_ref.dtype)


def _choose_tile_hw(hw, max_tile=4096):
    # Largest lane-dense (multiple-of-128) tile that divides HW, else full HW.
    if hw <= max_tile or hw % 128 != 0:
        return hw
    for t in range(max_tile - (max_tile % 128), 127, -128):
        if hw % t == 0:
            return t
    return hw


def skip_block_forward(x_nchw, w, b, gamma, beta, eps=1e-5, tile_hw=None):
    """Forward pass of Skip_Block (training-mode BatchNorm).

    x_nchw: (N, C_in, H, W) float32
    w:      (C_out, C_in)   -- 1x1 conv weight (spatial dims squeezed)
    b:      (C_out,)        -- conv bias (cancels exactly under training-mode BN)
    gamma, beta: (C_out,)   -- BatchNorm affine parameters
    """
    del b  # exact: training-mode BN removes any constant per-channel shift
    N, C_in, H, W = x_nchw.shape
    C_out = w.shape[0]
    HW = H * W
    M = N * HW

    if tile_hw is None:
        tile_hw = _choose_tile_hw(HW)
    assert HW % tile_hw == 0, "spatial tile must divide H*W"
    n_hw_tiles = HW // tile_hw
    grid = (N, n_hw_tiles)

    x3d = x_nchw.reshape(N, C_in, HW).astype(jnp.float32)   # view, no transpose
    w2d = w.astype(jnp.float32)                             # (C_out, C_in)

    # ---- Pass 1: per-channel sum / sum-of-squares of u = W @ x (no HBM y) ----
    csum, cssq = pl.pallas_call(
        _stats_kernel,
        out_shape=(
            jax.ShapeDtypeStruct((N, C_out, 1), jnp.float32),
            jax.ShapeDtypeStruct((N, C_out, 1), jnp.float32),
        ),
        grid=grid,
        in_specs=[
            pl.BlockSpec((None, C_in, tile_hw), lambda n, t: (n, 0, t)),
            pl.BlockSpec((C_out, C_in), lambda n, t: (0, 0)),
        ],
        out_specs=(
            pl.BlockSpec((None, C_out, 1), lambda n, t: (n, 0, 0)),
            pl.BlockSpec((None, C_out, 1), lambda n, t: (n, 0, 0)),
        ),
        compiler_params=pltpu.CompilerParams(
            dimension_semantics=("parallel", "arbitrary")),
    )(x3d, w2d)

    # ---- Glue: training-mode (biased) batch statistics -> fused BN affine ----
    mean = jnp.sum(csum, axis=0) / M                                  # (C_out, 1)
    var = jnp.maximum(jnp.sum(cssq, axis=0) / M - mean * mean, 0.0)   # clamp cancellation
    scale = gamma.reshape(C_out, 1).astype(jnp.float32) / jnp.sqrt(var + eps)
    shift = beta.reshape(C_out, 1).astype(jnp.float32) - mean * scale

    # ---- Pass 2: recompute conv + fused BN affine + LeakyReLU (lane-dense) ----
    out3d = pl.pallas_call(
        _fused_conv_bn_lrelu_kernel,
        out_shape=jax.ShapeDtypeStruct((N, C_out, HW), jnp.float32),
        grid=grid,
        in_specs=[
            pl.BlockSpec((None, C_in, tile_hw), lambda n, t: (n, 0, t)),
            pl.BlockSpec((C_out, C_in), lambda n, t: (0, 0)),
            pl.BlockSpec((C_out, 1), lambda n, t: (0, 0)),
            pl.BlockSpec((C_out, 1), lambda n, t: (0, 0)),
        ],
        out_specs=pl.BlockSpec((None, C_out, tile_hw), lambda n, t: (n, 0, t)),
        compiler_params=pltpu.CompilerParams(
            dimension_semantics=("parallel", "parallel")),
    )(x3d, w2d, scale, shift)

    return out3d.reshape(N, C_out, H, W)


def _reference(x, w, b, gamma, beta, eps=1e-5):
    # Pure-JAX reference mirroring PyTorch Skip_Block.forward (training-mode BN).
    y = jnp.einsum("nchw,oc->nohw", x, w) + b[None, :, None, None]
    mean = jnp.mean(y, axis=(0, 2, 3), keepdims=True)
    var = jnp.var(y, axis=(0, 2, 3), keepdims=True)        # biased, like BN
    z = (y - mean) / jnp.sqrt(var + eps)
    z = z * gamma[None, :, None, None] + beta[None, :, None, None]
    return jnp.where(z >= 0, z, 0.01 * z)


if __name__ == "__main__":
    key = jax.random.PRNGKey(0)
    k_x, k_w, k_b, k_g, k_be = jax.random.split(key, 5)

    N, C_in, C_out, H, W = 2, 4, 8, 16, 16

    x = jax.random.normal(k_x, (N, C_in, H, W), dtype=jnp.float32)
    # Deterministic "PyTorch-like" init: uniform(-k, k) with k = 1/sqrt(fan_in)
    bound = 1.0 / (C_in ** 0.5)
    w = jax.random.uniform(k_w, (C_out, C_in), minval=-bound, maxval=bound,
                           dtype=jnp.float32)
    b = jax.random.uniform(k_b, (C_out,), minval=-bound, maxval=bound,
                           dtype=jnp.float32)
    gamma = 1.0 + 0.1 * jax.random.normal(k_g, (C_out,), dtype=jnp.float32)
    beta = 0.1 * jax.random.normal(k_be, (C_out,), dtype=jnp.float32)

    out = skip_block_forward(x, w, b, gamma, beta)
    out = jax.block_until_ready(out)

    ref = _reference(x, w, b, gamma, beta)
    assert out.shape == (N, C_out, H, W)
    assert jnp.allclose(out, ref, atol=1e-4, rtol=1e-4), \
        float(jnp.max(jnp.abs(out - ref)))

    print("KERNEL_OK")
</pallas_src>

<mosaic_0001>
module attributes {stable_mosaic.version = 11 : i64} {
  func.func @_stats_kernel(%arg0: i32, %arg1: i32, %arg2: memref<1x4x256xf32, #tpu.memory_space<vmem>>, %arg3: memref<8x4xf32, #tpu.memory_space<vmem>>, %arg4: memref<1x8x1xf32, #tpu.memory_space<vmem>>, %arg5: memref<1x8x1xf32, #tpu.memory_space<vmem>>) attributes {dimension_semantics = [#tpu.dimension_semantics<parallel>, #tpu.dimension_semantics<arbitrary>], iteration_bounds = array<i64: 2, 1>, scalar_prefetch = 0 : i64, scratch_operands = 0 : i64, tpu.core_type = #tpu.core_type<tc>, window_params = [{transform_indices = @transform_0, window_bounds = array<i64: 1, 4, 256>}, {pipeline_mode = #tpu.pipeline_mode<synchronous>, transform_indices = @transform_1, window_bounds = array<i64: 8, 4>}, {transform_indices = @transform_2, window_bounds = array<i64: 1, 8, 1>}, {transform_indices = @transform_3, window_bounds = array<i64: 1, 8, 1>}]} {
    %c0_i32 = arith.constant 0 : i32
    %0 = arith.cmpi eq, %arg1, %c0_i32 : i32
    %1 = arith.extui %0 : i1 to i32
    %c0_i32_0 = arith.constant 0 : i32
    %2 = arith.cmpi ne, %1, %c0_i32_0 : i32
    scf.if %2 {
      %cst_19 = arith.constant 0.000000e+00 : f32
      %24 = vector.broadcast %cst_19 : f32 to vector<8x1xf32>
      %c0_20 = arith.constant 0 : index
      %c0_21 = arith.constant 0 : index
      %c0_22 = arith.constant 0 : index
      %25 = vector.load %arg4[%c0_20, %c0_21, %c0_22] : memref<1x8x1xf32, #tpu.memory_space<vmem>>, vector<1x8x1xf32>
      %26 = vector.shape_cast %25 : vector<1x8x1xf32> to vector<8x1xf32>
      %27 = vector.shape_cast %24 : vector<8x1xf32> to vector<1x8x1xf32>
      tpu.vector_store %arg4[%c0_20, %c0_21, %c0_22], %27 {strides = array<i32>} : memref<1x8x1xf32, #tpu.memory_space<vmem>>, vector<1x8x1xf32>,
      %cst_23 = arith.constant 0.000000e+00 : f32
      %28 = vector.broadcast %cst_23 : f32 to vector<8x1xf32>
      %c0_24 = arith.constant 0 : index
      %c0_25 = arith.constant 0 : index
      %c0_26 = arith.constant 0 : index
      %29 = vector.load %arg5[%c0_24, %c0_25, %c0_26] : memref<1x8x1xf32, #tpu.memory_space<vmem>>, vector<1x8x1xf32>
      %30 = vector.shape_cast %29 : vector<1x8x1xf32> to vector<8x1xf32>
      %31 = vector.shape_cast %28 : vector<8x1xf32> to vector<1x8x1xf32>
      tpu.vector_store %arg5[%c0_24, %c0_25, %c0_26], %31 {strides = array<i32>} : memref<1x8x1xf32, #tpu.memory_space<vmem>>, vector<1x8x1xf32>,
    } else {
    }
    %c0 = arith.constant 0 : index
    %c0_1 = arith.constant 0 : index
    %3 = vector.load %arg3[%c0, %c0_1] : memref<8x4xf32, #tpu.memory_space<vmem>>, vector<8x4xf32>
    %c0_2 = arith.constant 0 : index
    %c0_3 = arith.constant 0 : index
    %c0_4 = arith.constant 0 : index
    %4 = vector.load %arg2[%c0_2, %c0_3, %c0_4] : memref<1x4x256xf32, #tpu.memory_space<vmem>>, vector<1x4x256xf32>
    %5 = vector.shape_cast %4 : vector<1x4x256xf32> to vector<4x256xf32>
    %cst = arith.constant dense<0.000000e+00> : vector<8x256xf32>
    %6 = tpu.matmul %3, %5, %cst {dimension_numbers = #tpu.dot_dimension_numbers<[1], [0], [0], [1], [0, 0, 1, 1], [], []>} : vector<8x4xf32>, vector<4x256xf32>, vector<8x256xf32> -> vector<8x256xf32>
    %c0_5 = arith.constant 0 : index
    %c0_6 = arith.constant 0 : index
    %c0_7 = arith.constant 0 : index
    %7 = vector.load %arg4[%c0_5, %c0_6, %c0_7] : memref<1x8x1xf32, #tpu.memory_space<vmem>>, vector<1x8x1xf32>
    %8 = vector.shape_cast %7 : vector<1x8x1xf32> to vector<8x1xf32>
    %cst_8 = arith.constant dense<0.000000e+00> : vector<8xf32>
    %9 = vector.multi_reduction <add>, %6, %cst_8 [1] : vector<8x256xf32> to vector<8xf32>
    %10 = vector.shape_cast %9 : vector<8xf32> to vector<8x1xf32>
    %11 = arith.addf %8, %10 : vector<8x1xf32>
    %c0_9 = arith.constant 0 : index
    %c0_10 = arith.constant 0 : index
    %c0_11 = arith.constant 0 : index
    %12 = vector.load %arg4[%c0_9, %c0_10, %c0_11] : memref<1x8x1xf32, #tpu.memory_space<vmem>>, vector<1x8x1xf32>
    %13 = vector.shape_cast %12 : vector<1x8x1xf32> to vector<8x1xf32>
    %14 = vector.shape_cast %11 : vector<8x1xf32> to vector<1x8x1xf32>
    tpu.vector_store %arg4[%c0_9, %c0_10, %c0_11], %14 {strides = array<i32>} : memref<1x8x1xf32, #tpu.memory_space<vmem>>, vector<1x8x1xf32>,
    %c0_12 = arith.constant 0 : index
    %c0_13 = arith.constant 0 : index
    %c0_14 = arith.constant 0 : index
    %15 = vector.load %arg5[%c0_12, %c0_13, %c0_14] : memref<1x8x1xf32, #tpu.memory_space<vmem>>, vector<1x8x1xf32>
    %16 = vector.shape_cast %15 : vector<1x8x1xf32> to vector<8x1xf32>
    %17 = arith.mulf %6, %6 : vector<8x256xf32>
    %cst_15 = arith.constant dense<0.000000e+00> : vector<8xf32>
    %18 = vector.multi_reduction <add>, %17, %cst_15 [1] : vector<8x256xf32> to vector<8xf32>
    %19 = vector.shape_cast %18 : vector<8xf32> to vector<8x1xf32>
    %20 = arith.addf %16, %19 : vector<8x1xf32>
    %c0_16 = arith.constant 0 : index
    %c0_17 = arith.constant 0 : index
    %c0_18 = arith.constant 0 : index
    %21 = vector.load %arg5[%c0_16, %c0_17, %c0_18] : memref<1x8x1xf32, #tpu.memory_space<vmem>>, vector<1x8x1xf32>
    %22 = vector.shape_cast %21 : vector<1x8x1xf32> to vector<8x1xf32>
    %23 = vector.shape_cast %20 : vector<8x1xf32> to vector<1x8x1xf32>
    tpu.vector_store %arg5[%c0_16, %c0_17, %c0_18], %23 {strides = array<i32>} : memref<1x8x1xf32, #tpu.memory_space<vmem>>, vector<1x8x1xf32>,
    return
  }
  func.func @transform_0(%arg0: i32, %arg1: i32) -> (i32, i32, i32) {
    %c0_i32 = arith.constant 0 : i32
    %c0_i32_0 = arith.constant 0 : i32
    return %arg0, %c0_i32, %arg1 : i32, i32, i32
  }
  func.func @transform_1(%arg0: i32, %arg1: i32) -> (i32, i32) {
    %c0_i32 = arith.constant 0 : i32
    %c0_i32_0 = arith.constant 0 : i32
    %c0_i32_1 = arith.constant 0 : i32
    return %c0_i32, %c0_i32_0 : i32, i32
  }
  func.func @transform_2(%arg0: i32, %arg1: i32) -> (i32, i32, i32) {
    %c0_i32 = arith.constant 0 : i32
    %c0_i32_0 = arith.constant 0 : i32
    %c0_i32_1 = arith.constant 0 : i32
    return %arg0, %c0_i32, %c0_i32_0 : i32, i32, i32
  }
  func.func @transform_3(%arg0: i32, %arg1: i32) -> (i32, i32, i32) {
    %c0_i32 = arith.constant 0 : i32
    %c0_i32_0 = arith.constant 0 : i32
    %c0_i32_1 = arith.constant 0 : i32
    return %arg0, %c0_i32, %c0_i32_0 : i32, i32, i32
  }
}

</mosaic_0001>

<llo_original>
// kernel: tpu_custom_call.1
$region0: #{tpu_custom_call.1}
  #allocation0 [shape = 'u32[]', space=smem, size = 0x4, offset = 0x4, fixed_abs, tag = 'smem constant byte address 0x4 - core index']
  #allocation1 [shape = 'u32[72,128]{1,0:T(1,128)}', space=vmem, size = 0x9000, scoped, tag = 'internal scratch']
  %s0 = inlined_call_operand.hbm [shape: f32[2,4,256], index: 0, kind: input, shape index: {}]
  %s1 = inlined_call_operand.vmem [shape: f32[8,4], index: 1, kind: input, shape index: {}]
  %s2 = inlined_call_operand.vmem [shape: f32[2,8,1], index: 2, kind: output, shape index: {0}]
  %s3 = inlined_call_operand.vmem [shape: f32[2,8,1], index: 3, kind: output, shape index: {1}]
  %4 = xla_tuple %s2, %s3
  %s5 = sld [smem:[#allocation0]]
  $region57: #{tpu_custom_call.1} parent=0
    _
  %s7 = ssub.s32 1, %s5
  %s8 = scalar_select 0, %s7, %s5
  $region1: #{tpu_custom_call.1} parent=0
    #allocation2 [shape = 'u8[8192]{0}', space=vmem, size = 0x2000, scoped, tag = 'input window, operand 0']
    #allocation3 [shape = 's32[2]{0}', space=sflag, size = 0x8, scoped, tag = 'scoped memory for tpu_custom_call.1']
    %9 = vsyncpa [#allocation3], 0
    %s10 = scalar_lea.sflag [#allocation3], 1
    %11 = vsyncpa %s10, 0
    loop: start=0, step=1, limit=4
    $region2: #{tpu_custom_call.1} parent=1 // loop_pre_header
      _
    $region3: #{tpu_custom_call.1} parent=1 // loop_header
      %s13 = sphi 0, %s17
      %p14 = scmp.ge.s32.totalorder %s13, 4
      %s20 = sphi 0, %s32
      %s21 = sphi 0, %s28
      %s22 = sphi 0, %s20
      %s23 = sphi 0, %s21
      %s24 = sphi 0, %s22
      %s25 = sphi 0, %s23
      %s37 = sphi 0, %s39
      %s40 = sphi 0, %s37
      %s41 = sphi 0, %s40
      %s57 = sphi 0, %s41
      %s61 = sphi 0, %s61
      %s63 = sphi 0, %s61
      %s64 = sphi 0, %s63
      %s78 = sphi 0, %s64
      %s84 = sphi 0, %s86
      %s87 = sphi 0, %s84
      %s88 = sphi 0, %s87
      %s104 = sphi 0, %s88
      %s110 = sphi 0, %s112
      %s113 = sphi 0, %s110
      %s114 = sphi 0, %s113
      %s130 = sphi 0, %s114
    $region4: #{tpu_custom_call.1} parent=1 // loop_header_branch
      %16 = sbr.rel (%p14) target = $region8
    $region5: #{tpu_custom_call.1} parent=1 // loop_body
      %s18 = ssub.s32 %s13, 1
      %s19 = ssub.s32 %s13, 2
      %s26 = sadd.s32 1, %s21
      %p27 = scmp.ge.s32.totalorder %s26, 1
      %s28 = scalar_select %p27, 0, %s26
      %s29 = sadd.s32 1, %s20
      %s30 = scalar_select %p27, %s29, %s20
      %p31 = scmp.ge.s32.totalorder %s30, 2
      %s32 = scalar_select %p31, 0, %s30
      %s33 = ssub.s32 %s20, %s32
      %s34 = ssub.s32 %s21, %s28
      %s35 = sor.u32 %s33, %s34
      %p36 = scmp.eq.s32.totalorder %s35, 0
      %s38 = sadd.s32 %s37, 1
      %s39 = scalar_select %p36, %s37, %s38
      %p42 = pneg %p36
      %p43 = scmp.eq.s32.totalorder %s13, 1
      %p44 = por %p42, %p43
      %p45 = scmp.ne.s32.totalorder %s37, %s40
      %p46 = scmp.eq.s32.totalorder %s13, 0
      %p47 = por %p45, %p46
      %p48 = scmp.ne.s32.totalorder %s37, %s40
      %p49 = scmp.eq.s32.totalorder %s18, 1
      %p50 = por %p48, %p49
      %p51 = scmp.ne.s32.totalorder %s40, %s41
      %p52 = scmp.eq.s32.totalorder %s18, 0
      %p53 = por %p51, %p52
      %p54 = scmp.ne.s32.totalorder %s40, %s41
      %p55 = scmp.eq.s32.totalorder %s19, 1
      %p56 = por %p54, %p55
      %p58 = scmp.ne.s32.totalorder %s41, %s57
      %p59 = scmp.eq.s32.totalorder %s19, 0
      %p60 = por %p58, %p59
      %s62 = sadd.s32 %s61, 1
      %p65 = scmp.eq.s32.totalorder %s13, 1
      %p66 = scmp.ne.s32.totalorder %s61, %s63
      %p67 = scmp.eq.s32.totalorder %s13, 0
      %p68 = por %p66, %p67
      %p69 = scmp.ne.s32.totalorder %s61, %s63
      %p70 = scmp.eq.s32.totalorder %s18, 1
      %p71 = por %p69, %p70
      %p72 = scmp.ne.s32.totalorder %s63, %s64
      %p73 = scmp.eq.s32.totalorder %s18, 0
      %p74 = por %p72, %p73
      %p75 = scmp.ne.s32.totalorder %s63, %s64
      %p76 = scmp.eq.s32.totalorder %s19, 1
      %p77 = por %p75, %p76
      %p79 = scmp.ne.s32.totalorder %s64, %s78
      %p80 = scmp.eq.s32.totalorder %s19, 0
      %p81 = por %p79, %p80
      %s82 = ssub.s32 %s20, %s32
      %p83 = scmp.eq.s32.totalorder %s82, 0
      %s85 = sadd.s32 %s84, 1
      %s86 = scalar_select %p83, %s84, %s85
      %p89 = pneg %p83
      %p90 = scmp.eq.s32.totalorder %s13, 1
      %p91 = por %p89, %p90
      %p92 = scmp.ne.s32.totalorder %s84, %s87
      %p93 = scmp.eq.s32.totalorder %s13, 0
      %p94 = por %p92, %p93
      %p95 = scmp.ne.s32.totalorder %s84, %s87
      %p96 = scmp.eq.s32.totalorder %s18, 1
      %p97 = por %p95, %p96
      %p98 = scmp.ne.s32.totalorder %s87, %s88
      %p99 = scmp.eq.s32.totalorder %s18, 0
      %p100 = por %p98, %p99
      %p101 = scmp.ne.s32.totalorder %s87, %s88
      %p102 = scmp.eq.s32.totalorder %s19, 1
      %p103 = por %p101, %p102
      %p105 = scmp.ne.s32.totalorder %s88, %s104
      %p106 = scmp.eq.s32.totalorder %s19, 0
      %p107 = por %p105, %p106
      %s108 = ssub.s32 %s20, %s32
      %p109 = scmp.eq.s32.totalorder %s108, 0
      %s111 = sadd.s32 %s110, 1
      %s112 = scalar_select %p109, %s110, %s111
      %p115 = pneg %p109
      %p116 = scmp.eq.s32.totalorder %s13, 1
      %p117 = por %p115, %p116
      %p118 = scmp.ne.s32.totalorder %s110, %s113
      %p119 = scmp.eq.s32.totalorder %s13, 0
      %p120 = por %p118, %p119
      %p121 = scmp.ne.s32.totalorder %s110, %s113
      %p122 = scmp.eq.s32.totalorder %s18, 1
      %p123 = por %p121, %p122
      %p124 = scmp.ne.s32.totalorder %s113, %s114
      %p125 = scmp.eq.s32.totalorder %s18, 0
      %p126 = por %p124, %p125
      %p127 = scmp.ne.s32.totalorder %s113, %s114
      %p128 = scmp.eq.s32.totalorder %s19, 1
      %p129 = por %p127, %p128
      %p131 = scmp.ne.s32.totalorder %s114, %s130
      %p132 = scmp.eq.s32.totalorder %s19, 0
      %p133 = por %p131, %p132
      %p134 = scmp.le.s32.totalorder 1, %s13
      %p135 = scmp.lt.s32.totalorder %s13, 3
      %p136 = pnand %p134, %p135
      %p137 = pneg %p136
      // Predicated region
      $region9: #{tpu_custom_call.1} parent=5 // pred_check
        _
      $region10: #{tpu_custom_call.1} parent=5 // pred_check_branch
        %139 = sbr.rel (%p136) target = $region12
      $region11: #{tpu_custom_call.1} parent=5 // pred_region
        %s140 = ssub.s32 %s13, 1
        // Predicated region
        $region13: #{tpu_custom_call.1} parent=11 // pred_check
          %p141 = pneg %p74
        $region14: #{tpu_custom_call.1} parent=11 // pred_check_branch
          %143 = sbr.rel (%p141) target = $region16
        $region15: #{tpu_custom_call.1} parent=11 // pred_region
          _
        $region16: #{tpu_custom_call.1} parent=11 // pred_fallthru
          _
      $region12: #{tpu_custom_call.1} parent=5 // pred_fallthru
        _
      %p144 = scmp.lt.s32.totalorder %s13, 2
      // Predicated region
      $region17: #{tpu_custom_call.1} parent=5 // pred_check
        %p145 = pneg %p144
      $region18: #{tpu_custom_call.1} parent=5 // pred_check_branch
        %147 = sbr.rel (%p145) target = $region20
      $region19: #{tpu_custom_call.1} parent=5 // pred_region
        // Predicated region
        $region21: #{tpu_custom_call.1} parent=19 // pred_check
          %p148 = pneg %p47
        $region22: #{tpu_custom_call.1} parent=19 // pred_check_branch
          %150 = sbr.rel (%p148) target = $region24
        $region23: #{tpu_custom_call.1} parent=19 // pred_region
          %s151 = sand.u32 %s37, 1
          %s152 = scalar_lea.sflag [#allocation3], %s151
          %s153 = sand.u32 %s37, 1
          %s154 = smul.addr %s153, 8
          %s155 = scalar_lea.vmem [#allocation2], %s154
          %s156 = smul.u32 2, %s21
          %158 = vsyncadd %s152, 0
          %s159 = smul.addr %s20, 2
          %s160 = sadd.s32 %s156, %s159
          %s161 = smul.addr %s160, 4
          %s162 = scalar_lea.hbm %s0, %s161
          %s164 = sshll.u32 %s162, 4
          %s165 = int_to_ptr.hbm [resolvable:$true] %s164
          %s166 = sshll.u32 %s155, 4
          %s167 = int_to_ptr.vmem [resolvable:$true] %s166
          %169 = dma.hbm_to_vmem [thread:$0]  %s165, 128, %s167, %s152
        $region24: #{tpu_custom_call.1} parent=19 // pred_fallthru
          _
      $region20: #{tpu_custom_call.1} parent=5 // pred_fallthru
        _
      %p170 = scmp.le.s32.totalorder 1, %s13
      %p171 = scmp.lt.s32.totalorder %s13, 3
      %p172 = pnand %p170, %p171
      %p173 = pneg %p172
      // Predicated region
      $region25: #{tpu_custom_call.1} parent=5 // pred_check
        _
      $region26: #{tpu_custom_call.1} parent=5 // pred_check_branch
        %175 = sbr.rel (%p172) target = $region28
      $region27: #{tpu_custom_call.1} parent=5 // pred_region
        %s176 = ssub.s32 %s13, 1
        %s177 = sand.u32 %s40, 1
        %s178 = scalar_lea.sflag [#allocation3], %s177
        %s179 = sand.u32 %s40, 1
        %s180 = smul.addr %s179, 8
        %s181 = scalar_lea.vmem [#allocation2], %s180
        // Predicated region
        $region29: #{tpu_custom_call.1} parent=27 // pred_check
          %p182 = pneg %p53
        $region30: #{tpu_custom_call.1} parent=27 // pred_check_branch
          %184 = sbr.rel (%p182) target = $region32
        $region31: #{tpu_custom_call.1} parent=27 // pred_region
          %186 = dma.done %s178, 128
        $region32: #{tpu_custom_call.1} parent=27 // pred_fallthru
          _
        %s187 = sand.u32 %s40, 1
        %s188 = scalar_lea.sflag [#allocation3], %s187
        %s189 = sand.u32 %s40, 1
        %s190 = smul.addr %s189, 8
        %s191 = scalar_lea.vmem [#allocation2], %s190
        %p192 = pneg %p53
        %p193 = pneg %p50
        %p194 = pneg %p74
        %p195 = pneg %p71
        %p196 = pneg %p100
        %p197 = pneg %p97
        %p198 = scmp.lt.s32.totalorder %s22, 1
        %s199 = scalar_select %p198, %s22, 1
        %s200 = smul.addr %s199, 8
        %s201 = scalar_lea.vmem %s2, %s200
        %p202 = pneg %p126
        %p203 = pneg %p123
        %p204 = scmp.lt.s32.totalorder %s22, 1
        %s205 = scalar_select %p204, %s22, 1
        %s206 = smul.addr %s205, 8
        %s207 = scalar_lea.vmem %s3, %s206
        %s208 = smul.u32 2, %s23
        %p209 = scmp.lt.s32.totalorder %s22, 1
        %s210 = scalar_select %p209, %s22, 1
        %s211 = smul.addr %s210, 8
        %s212 = scalar_lea.vmem %s2, %s211
        %p213 = scmp.lt.s32.totalorder %s22, 1
        %s214 = scalar_select %p213, %s22, 1
        %s215 = smul.addr %s214, 8
        %s216 = scalar_lea.vmem %s3, %s215
        %p217 = scmp.eq.s32.totalorder %s23, 0
        // Predicated region
        $region33: #{tpu_custom_call.1} parent=27 // pred_check
          %p218 = pneg %p217
        $region34: #{tpu_custom_call.1} parent=27 // pred_check_branch
          %220 = sbr.rel (%p218) target = $region36
        $region35: #{tpu_custom_call.1} parent=27 // pred_region
          %vm221 = vcmask 7168
          %222 = vst.msk [vmem:[%s212] sm:$0xff] %vm221, 0.0
          %223 = vst.msk [vmem:[%s216] sm:$0xff] %vm221, 0.0
        $region36: #{tpu_custom_call.1} parent=27 // pred_fallthru
          _
        %v224 = vld [vmem:[%s1] sm:$0xff]
        %v225 = vld [vmem:[%s181] sm:$0xff]
        %227 = vst [vmem:[#allocation1] ss:$2 sm:$0xff] %v225
        %v228 = vld.sshfl [vmem:[#allocation1] sm:$0xff pattern:$0x75316420]
        %v229 = vld.sshfl [vmem:[#allocation1 + $0x8] sm:$0xff pattern:$0x75316420]
        %vm230 = vcmask 31744
        %v232 = vsel %vm230, %v224, 0
        %vm234 = vcmask 1043456
        %v235 = vsel %vm234, %v228, 0
        %v237 = vsel %vm234, %v229, 0
        %239 = vmatpush.msra.mxu0 0.0
        %240 = vmatpush.msra.mxu0 0.0
        %241 = vmatpush.msra.mxu0 0.0
        %242 = vmatpush.msra.mxu0 0.0
        %243 = vmatpush.msra.mxu0 0.0
        %244 = vmatpush.msra.mxu0 0.0
        %245 = vmatpush.msra.mxu0 0.0
        %246 = vmatpush.msra.mxu0 0.0
        %247 = vmatpush.msra.mxu0 0.0
        %248 = vmatpush.msra.mxu0 0.0
        %249 = vmatpush.msra.mxu0 0.0
        %250 = vmatpush.msra.mxu0 0.0
        %251 = vmatpush.msra.mxu0 0.0
        %252 = vmatpush.msra.mxu0 0.0
        %253 = vmatpush.msra.mxu0 0.0
        %254 = vmatpush.msra.mxu0 %v235
        %255 = vmatmul.f32.gmra.mxu0 %v232
        %v256 = vpop.f32.mrf.mxu0
        %v257 = vadd.f32 0.0, %v256
        %258 = vdwg.mxu0
        %259 = vmatpush.msra.mxu0 0.0
        %260 = vmatpush.msra.mxu0 0.0
        %261 = vmatpush.msra.mxu0 0.0
        %262 = vmatpush.msra.mxu0 0.0
        %263 = vmatpush.msra.mxu0 0.0
        %264 = vmatpush.msra.mxu0 0.0
        %265 = vmatpush.msra.mxu0 0.0
        %266 = vmatpush.msra.mxu0 0.0
        %267 = vmatpush.msra.mxu0 0.0
        %268 = vmatpush.msra.mxu0 0.0
        %269 = vmatpush.msra.mxu0 0.0
        %270 = vmatpush.msra.mxu0 0.0
        %271 = vmatpush.msra.mxu0 0.0
        %272 = vmatpush.msra.mxu0 0.0
        %273 = vmatpush.msra.mxu0 0.0
        %274 = vmatpush.msra.mxu0 %v237
        %275 = vmatmul.f32.gmra.mxu0 %v232
        %v276 = vpop.f32.mrf.mxu0
        %v277 = vadd.f32 0.0, %v276
        %278 = vdwg.mxu0
        %v279 = vld [vmem:[%s212] sm:$0xff]
        %v280 = vadd.f32 %v257, %v277
        %281 = vadd.xlane.f32.xlu0 %v280
        %v282 = vpop.xlane.xlu0 %281
        %v283 = vadd.f32 %v279, %v282
        %vm284 = vcmask 7168
        %285 = vst.msk [vmem:[%s212] sm:$0xff] %vm284, %v283
        %v286 = vld [vmem:[%s216] sm:$0xff]
        %v287 = vmul.f32 %v257, %v257
        %v288 = vmul.f32 %v277, %v277
        %v289 = vadd.f32 %v287, %v288
        %290 = vadd.xlane.f32.xlu0 %v289
        %v291 = vpop.xlane.xlu0 %290
        %v292 = vadd.f32 %v286, %v291
        %293 = vst.msk [vmem:[%s216] sm:$0xff] %vm284, %v292
        %p294 = scmp.lt.s32.totalorder %s22, 1
        %s295 = scalar_select %p294, %s22, 1
        %s296 = smul.addr %s295, 8
        %s297 = scalar_lea.vmem %s2, %s296
        %p298 = scmp.lt.s32.totalorder %s22, 1
        %s299 = scalar_select %p298, %s22, 1
        %s300 = smul.addr %s299, 8
        %s301 = scalar_lea.vmem %s3, %s300
        // Predicated region
        $region37: #{tpu_custom_call.1} parent=27 // pred_check
          %p302 = pneg %p97
        $region38: #{tpu_custom_call.1} parent=27 // pred_check_branch
          %304 = sbr.rel (%p302) target = $region40
        $region39: #{tpu_custom_call.1} parent=27 // pred_region
          _
        $region40: #{tpu_custom_call.1} parent=27 // pred_fallthru
          _
        // Predicated region
        $region41: #{tpu_custom_call.1} parent=27 // pred_check
          %p305 = pneg %p123
        $region42: #{tpu_custom_call.1} parent=27 // pred_check_branch
          %307 = sbr.rel (%p305) target = $region44
        $region43: #{tpu_custom_call.1} parent=27 // pred_region
          _
        $region44: #{tpu_custom_call.1} parent=27 // pred_fallthru
          _
      $region28: #{tpu_custom_call.1} parent=5 // pred_fallthru
        _
      %p308 = scmp.le.s32.totalorder 2, %s13
      // Predicated region
      $region45: #{tpu_custom_call.1} parent=5 // pred_check
        %p309 = pneg %p308
      $region46: #{tpu_custom_call.1} parent=5 // pred_check_branch
        %311 = sbr.rel (%p309) target = $region48
      $region47: #{tpu_custom_call.1} parent=5 // pred_region
        %s312 = ssub.s32 %s13, 2
        // Predicated region
        $region49: #{tpu_custom_call.1} parent=47 // pred_check
          %p313 = pneg %p103
        $region50: #{tpu_custom_call.1} parent=47 // pred_check_branch
          %315 = sbr.rel (%p313) target = $region52
        $region51: #{tpu_custom_call.1} parent=47 // pred_region
          %p316 = scmp.lt.s32.totalorder %s24, 1
          %s317 = scalar_select %p316, %s24, 1
          %s318 = smul.addr %s317, 8
          %s319 = scalar_lea.vmem %s2, %s318
        $region52: #{tpu_custom_call.1} parent=47 // pred_fallthru
          _
        // Predicated region
        $region53: #{tpu_custom_call.1} parent=47 // pred_check
          %p320 = pneg %p129
        $region54: #{tpu_custom_call.1} parent=47 // pred_check_branch
          %322 = sbr.rel (%p320) target = $region56
        $region55: #{tpu_custom_call.1} parent=47 // pred_region
          %p323 = scmp.lt.s32.totalorder %s24, 1
          %s324 = scalar_select %p323, %s24, 1
          %s325 = smul.addr %s324, 8
          %s326 = scalar_lea.vmem %s3, %s325
        $region56: #{tpu_custom_call.1} parent=47 // pred_fallthru
          _
      $region48: #{tpu_custom_call.1} parent=5 // pred_fallthru
        _
    $region6: #{tpu_custom_call.1} parent=1 // loop_footer
      %s17 = sadd.s32 1, %s13
    $region7: #{tpu_custom_call.1} parent=1 // loop_footer_branch
      %12 = sbr.rel target = $region3
    $region8: #{tpu_custom_call.1} parent=1 // loop_exit
      _
    %327 = vsyncpa [#allocation3], 1
    %s328 = scalar_lea.sflag [#allocation3], 1
    %329 = vsyncpa %s328, 1

</llo_original>
